<compile_context>
chip_gen: v7x
topology: tpu7x:2x2x1
jax: 0.10.0
libtpu: 0.0.40
codegen_flags: <defaults>
</compile_context>

<pallas_src>
import functools

import jax
import jax.numpy as jnp
from jax.experimental import pallas as pl
from jax.experimental.pallas import tpu as pltpu


def _round_up(x, m):
    return (x + m - 1) // m * m


def _pad_feature(d):
    # Lane padding.  Round large dims to 256 so the 256x256 MXU passes on
    # v6e/v7x stay full; tiny dims only need the 128-lane minimum.
    return _round_up(d, 256) if d > 128 else _round_up(d, 128)


def _vmem_capacity_bytes():
    """Per-TensorCore VMEM capacity; conservative 64 MiB fallback (v7x)."""
    try:
        cap = int(getattr(pltpu.get_tpu_info(), "vmem_capacity_bytes", 0))
        if cap > 0:
            return cap
    except Exception:
        pass
    return 64 * 1024 * 1024


def _ffn_kernel(x_ref, w1_ref, b1_ref, w2_ref, b2_ref, o_ref, acc_ref):
    # x_ref : (tm, dim_p)   native dtype (f32)      w1_ref: (dim_p, tk_h) bf16
    # b1_ref: (1, tk_h) f32                         w2_ref: (tk_h, out_p) bf16
    # b2_ref: (1, out_p) f32                        o_ref : (tm, out_p)
    # acc_ref: (tm, out_p) f32 scratch accumulator over hidden chunks.
    k = pl.program_id(1)

    @pl.when(k == 0)
    def _init():
        acc_ref[...] = jnp.zeros_like(acc_ref)

    # Cast the activation tile in-kernel (cheap VPU work; no wrapper HBM pass).
    x = x_ref[...].astype(w1_ref.dtype)
    h = jnp.dot(x, w1_ref[...], preferred_element_type=jnp.float32)
    h = h + b1_ref[...]
    # tanh-approx GELU: small polynomial on the VPU + tanh on the EUP slot.
    h = jax.nn.gelu(h, approximate=True)
    # Dropout -> identity (eval mode).
    acc_ref[...] += jnp.dot(h.astype(w2_ref.dtype), w2_ref[...],
                            preferred_element_type=jnp.float32)

    @pl.when(k == pl.num_programs(1) - 1)
    def _store():
        o_ref[...] = (acc_ref[...] + b2_ref[...]).astype(o_ref.dtype)


def prepare_ffn_params(w1, b1, w2, b2):
    """Pad + cast the weights ONCE (outside the per-call hot path).

    Weights are stored as (in_features, out_features) so the kernel computes
    x @ W + b (== PyTorch x @ W.T + b with W of shape (out, in)).
    Zero-padding is mathematically exact for this FFN.
    """
    dim, hidden = w1.shape
    out_dim = w2.shape[1]
    dim_p = _pad_feature(dim)
    out_p = _pad_feature(out_dim)
    # Pad hidden so it can be split into lane-aligned chunks if needed.
    hid_p = _round_up(hidden, 512) if hidden > 512 else _pad_feature(hidden)

    w1p = jnp.pad(w1, ((0, dim_p - dim), (0, hid_p - hidden))).astype(jnp.bfloat16)
    w2p = jnp.pad(w2, ((0, hid_p - hidden), (0, out_p - out_dim))).astype(jnp.bfloat16)
    b1p = jnp.pad(b1, (0, hid_p - hidden)).reshape(1, hid_p).astype(jnp.float32)
    b2p = jnp.pad(b2, (0, out_p - out_dim)).reshape(1, out_p).astype(jnp.float32)
    return (w1p, b1p, w2p, b2p), out_dim


@functools.partial(jax.jit, static_argnames=("out_dim", "tm", "hidden_chunk"))
def feed_forward(x, w1p, b1p, w2p, b2p, out_dim, tm=None, hidden_chunk=None):
    """x: (B, N, dim) -> (B, N, out_dim).  Fused fc1 + GELU + fc2 Pallas kernel."""
    B, N, dim = x.shape
    dim_p, hid_p = w1p.shape
    out_p = w2p.shape[1]
    M = B * N

    xbytes = jnp.dtype(x.dtype).itemsize

    vmem_cap = _vmem_capacity_bytes()
    budget = max(vmem_cap - 16 * 1024 * 1024, 32 * 1024 * 1024)

    # Row tile: bigger tiles amortize the ~0.35 us/step pipeline overhead on the
    # 128 MiB-VMEM chips; keep 256 on 64 MiB (v7x).
    if tm is None:
        tm = 512 if vmem_cap >= 96 * 1024 * 1024 else 256
    tm_eff = min(tm, _round_up(M, 8))
    M_p = _round_up(M, tm_eff)

    def vmem_est(tk):
        return (
            2 * tm_eff * dim_p * xbytes     # x tile, double-buffered
            + 2 * dim_p * tk * 2            # w1 chunk (bf16), double-buffered
            + 2 * tk * out_p * 2            # w2 chunk (bf16), double-buffered
            + 2 * tk * 4 + 2 * out_p * 4    # biases (f32)
            + 2 * tm_eff * out_p * xbytes   # out tile, double-buffered
            + tm_eff * out_p * 4            # f32 accumulator scratch
            + tm_eff * tk * 4               # f32 hidden intermediate (spill)
        )

    # Hidden-chunk selection: keep the whole hidden dim per step when it fits
    # comfortably (weights then stay VMEM-resident across the M grid axis);
    # otherwise stream lane-aligned hidden chunks through the accumulator.
    if hidden_chunk is not None:
        assert hid_p % hidden_chunk == 0 and hidden_chunk % 128 == 0
        tk_h = hidden_chunk
    else:
        tk_h = hid_p
        for cand in (hid_p, 2048, 1024, 512, 256, 128):
            if cand <= hid_p and hid_p % cand == 0:
                tk_h = cand
                if vmem_est(cand) <= 0.7 * budget:
                    break
        # TODO(synk): if even tk_h=128 exceeds the budget, shrink tm_eff too.

    n_chunks = hid_p // tk_h
    grid = (M_p // tm_eff, n_chunks)

    vmem_limit = int(min(max(2 * vmem_est(tk_h), 32 * 1024 * 1024), budget))

    # Pad tokens / features; zero rows are sliced away after the call.
    x2d = jnp.pad(x.reshape(M, dim), ((0, M_p - M), (0, dim_p - dim)))

    cost = pl.CostEstimate(
        flops=2 * M_p * dim_p * hid_p + 2 * M_p * hid_p * out_p,
        transcendentals=M_p * hid_p,
        bytes_accessed=(M_p * dim_p * xbytes
                        + dim_p * hid_p * 2 + hid_p * out_p * 2
                        + (hid_p + out_p) * 4
                        + M_p * out_p * xbytes),
    )

    out2d = pl.pallas_call(
        _ffn_kernel,
        out_shape=jax.ShapeDtypeStruct((M_p, out_p), x.dtype),
        grid_spec=pltpu.PrefetchScalarGridSpec(
            num_scalar_prefetch=0,
            grid=grid,
            in_specs=[
                pl.BlockSpec((tm_eff, dim_p), lambda i, k: (i, 0)),
                pl.BlockSpec((dim_p, tk_h), lambda i, k: (0, k)),
                pl.BlockSpec((1, tk_h), lambda i, k: (0, k)),
                pl.BlockSpec((tk_h, out_p), lambda i, k: (k, 0)),
                pl.BlockSpec((1, out_p), lambda i, k: (0, 0)),
            ],
            out_specs=pl.BlockSpec((tm_eff, out_p), lambda i, k: (i, 0)),
            scratch_shapes=[pltpu.VMEM((tm_eff, out_p), jnp.float32)],
        ),
        compiler_params=pltpu.CompilerParams(
            dimension_semantics=("parallel", "arbitrary"),
            vmem_limit_bytes=vmem_limit,
        ),
        cost_estimate=cost,
    )(x2d, w1p, b1p, w2p, b2p)

    return out2d[:M, :out_dim].reshape(B, N, out_dim)


def _reference(x, w1, b1, w2, b2):
    # Same bf16-input / f32-accumulate recipe, but EXACT (erf) GELU like
    # torch.nn.GELU() -- validates the tanh-approx kernel against torch parity.
    xb = x.astype(jnp.bfloat16)
    h = jnp.einsum("bnd,dh->bnh", xb, w1.astype(jnp.bfloat16),
                   preferred_element_type=jnp.float32) + b1
    h = jax.nn.gelu(h, approximate=False)
    y = jnp.einsum("bnh,ho->bno", h.astype(jnp.bfloat16),
                   w2.astype(jnp.bfloat16),
                   preferred_element_type=jnp.float32) + b2
    return y


def _make_params(key, dim, hidden_dim, out_dim):
    k1, k2, k3, k4 = jax.random.split(key, 4)
    # PyTorch Linear is W (out, in), b (out,); stored transposed as (in, out).
    w1 = jax.random.normal(k1, (dim, hidden_dim), jnp.float32) * (1.0 / dim ** 0.5)
    b1 = jax.random.normal(k2, (hidden_dim,), jnp.float32) * 0.01
    w2 = jax.random.normal(k3, (hidden_dim, out_dim), jnp.float32) * (1.0 / hidden_dim ** 0.5)
    b2 = jax.random.normal(k4, (out_dim,), jnp.float32) * 0.01
    return w1, b1, w2, b2


if __name__ == "__main__":
    key = jax.random.PRNGKey(0)

    # Test 1: lane-aligned config (dim / hidden / out multiples of 128).
    B, N, dim, hidden_dim = 2, 16, 128, 256
    out_dim = dim  # out_dim=None in the module -> dim
    kx, kp = jax.random.split(key)
    x = jax.random.normal(kx, (B, N, dim), jnp.float32)
    w1, b1, w2, b2 = _make_params(kp, dim, hidden_dim, out_dim)
    (w1p, b1p, w2p, b2p), od = prepare_ffn_params(w1, b1, w2, b2)

    y = jax.block_until_ready(feed_forward(x, w1p, b1p, w2p, b2p, out_dim=od))
    y_ref = _reference(x, w1, b1, w2, b2)
    assert y.shape == (B, N, out_dim)
    assert jnp.allclose(y, y_ref, atol=5e-2, rtol=5e-2), "mismatch (aligned case)"

    # Test 2: non-aligned feature dims exercise the zero-padding path.
    B2, N2, dim2, hid2 = 2, 10, 48, 96
    kx2, kp2 = jax.random.split(jax.random.PRNGKey(1))
    x2 = jax.random.normal(kx2, (B2, N2, dim2), jnp.float32)
    w1b_, b1b_, w2b_, b2b_ = _make_params(kp2, dim2, hid2, dim2)
    (w1p2, b1p2, w2p2, b2p2), od2 = prepare_ffn_params(w1b_, b1b_, w2b_, b2b_)

    y2 = jax.block_until_ready(feed_forward(x2, w1p2, b1p2, w2p2, b2p2, out_dim=od2))
    y2_ref = _reference(x2, w1b_, b1b_, w2b_, b2b_)
    assert y2.shape == (B2, N2, dim2)
    assert jnp.allclose(y2, y2_ref, atol=5e-2, rtol=5e-2), "mismatch (padded case)"

    # Test 3: force the hidden-chunk accumulator path (2 chunks of 128).
    y3 = jax.block_until_ready(
        feed_forward(x, w1p, b1p, w2p, b2p, out_dim=od, hidden_chunk=128))
    assert jnp.allclose(y3, y_ref, atol=5e-2, rtol=5e-2), "mismatch (chunked case)"

    print("KERNEL_OK")
</pallas_src>

<mosaic_0001>
module attributes {stable_mosaic.version = 11 : i64} {
  func.func @_ffn_kernel(%arg0: i32, %arg1: i32, %arg2: memref<32x128xf32, #tpu.memory_space<vmem>>, %arg3: memref<128x256xbf16, #tpu.memory_space<vmem>>, %arg4: memref<1x256xf32, #tpu.memory_space<vmem>>, %arg5: memref<256x128xbf16, #tpu.memory_space<vmem>>, %arg6: memref<1x128xf32, #tpu.memory_space<vmem>>, %arg7: memref<32x128xf32, #tpu.memory_space<vmem>>, %arg8: memref<32x128xf32, #tpu.memory_space<vmem>>) attributes {dimension_semantics = [#tpu.dimension_semantics<parallel>, #tpu.dimension_semantics<arbitrary>], iteration_bounds = array<i64: 1, 1>, scalar_prefetch = 0 : i64, scratch_operands = 1 : i64, tpu.core_type = #tpu.core_type<tc>, window_params = [{transform_indices = @transform_0, window_bounds = array<i64: 32, 128>}, {transform_indices = @transform_1, window_bounds = array<i64: 128, 256>}, {transform_indices = @transform_2, window_bounds = array<i64: 1, 256>}, {transform_indices = @transform_3, window_bounds = array<i64: 256, 128>}, {pipeline_mode = #tpu.pipeline_mode<synchronous>, transform_indices = @transform_4, window_bounds = array<i64: 1, 128>}, {transform_indices = @transform_5, window_bounds = array<i64: 32, 128>}]} {
    %c0_i32 = arith.constant 0 : i32
    %0 = arith.cmpi eq, %arg1, %c0_i32 : i32
    %1 = arith.extui %0 : i1 to i32
    %c0_i32_0 = arith.constant 0 : i32
    %2 = arith.cmpi ne, %1, %c0_i32_0 : i32
    scf.if %2 {
      %cst_19 = arith.constant 0.000000e+00 : f32
      %32 = vector.broadcast %cst_19 : f32 to vector<32x128xf32>
      %c0_20 = arith.constant 0 : index
      %c0_21 = arith.constant 0 : index
      %33 = vector.load %arg8[%c0_20, %c0_21] : memref<32x128xf32, #tpu.memory_space<vmem>>, vector<32x128xf32>
      tpu.vector_store %arg8[%c0_20, %c0_21], %32 {strides = array<i32>} : memref<32x128xf32, #tpu.memory_space<vmem>>, vector<32x128xf32>,
    } else {
    }
    %c0 = arith.constant 0 : index
    %c0_1 = arith.constant 0 : index
    %3 = vector.load %arg2[%c0, %c0_1] : memref<32x128xf32, #tpu.memory_space<vmem>>, vector<32x128xf32>
    %4 = arith.truncf %3 : vector<32x128xf32> to vector<32x128xbf16>
    %c0_2 = arith.constant 0 : index
    %c0_3 = arith.constant 0 : index
    %5 = vector.load %arg3[%c0_2, %c0_3] : memref<128x256xbf16, #tpu.memory_space<vmem>>, vector<128x256xbf16>
    %cst = arith.constant dense<0.000000e+00> : vector<32x256xf32>
    %6 = tpu.matmul %4, %5, %cst {dimension_numbers = #tpu.dot_dimension_numbers<[1], [0], [0], [1], [0, 0, 1, 1], [], []>} : vector<32x128xbf16>, vector<128x256xbf16>, vector<32x256xf32> -> vector<32x256xf32>
    %c0_4 = arith.constant 0 : index
    %c0_5 = arith.constant 0 : index
    %7 = vector.load %arg4[%c0_4, %c0_5] : memref<1x256xf32, #tpu.memory_space<vmem>>, vector<1x256xf32>
    %8 = vector.broadcast %7 : vector<1x256xf32> to vector<32x256xf32>
    %9 = arith.addf %6, %8 : vector<32x256xf32>
    %10 = arith.mulf %9, %9 : vector<32x256xf32>
    %11 = arith.mulf %9, %10 : vector<32x256xf32>
    %cst_6 = arith.constant 4.471500e-02 : f32
    %12 = vector.broadcast %cst_6 : f32 to vector<32x256xf32>
    %13 = arith.mulf %12, %11 : vector<32x256xf32>
    %14 = arith.addf %9, %13 : vector<32x256xf32>
    %cst_7 = arith.constant 0.797884583 : f32
    %15 = vector.broadcast %cst_7 : f32 to vector<32x256xf32>
    %16 = arith.mulf %15, %14 : vector<32x256xf32>
    %17 = math.tanh %16 : vector<32x256xf32>
    %cst_8 = arith.constant 1.000000e+00 : f32
    %18 = vector.broadcast %cst_8 : f32 to vector<32x256xf32>
    %19 = arith.addf %18, %17 : vector<32x256xf32>
    %cst_9 = arith.constant 5.000000e-01 : f32
    %20 = vector.broadcast %cst_9 : f32 to vector<32x256xf32>
    %21 = arith.mulf %20, %19 : vector<32x256xf32>
    %22 = arith.mulf %9, %21 : vector<32x256xf32>
    %c0_10 = arith.constant 0 : index
    %c0_11 = arith.constant 0 : index
    %23 = vector.load %arg8[%c0_10, %c0_11] : memref<32x128xf32, #tpu.memory_space<vmem>>, vector<32x128xf32>
    %24 = arith.truncf %22 : vector<32x256xf32> to vector<32x256xbf16>
    %c0_12 = arith.constant 0 : index
    %c0_13 = arith.constant 0 : index
    %25 = vector.load %arg5[%c0_12, %c0_13] : memref<256x128xbf16, #tpu.memory_space<vmem>>, vector<256x128xbf16>
    %cst_14 = arith.constant dense<0.000000e+00> : vector<32x128xf32>
    %26 = tpu.matmul %24, %25, %cst_14 {dimension_numbers = #tpu.dot_dimension_numbers<[1], [0], [0], [1], [0, 0, 1, 1], [], []>} : vector<32x256xbf16>, vector<256x128xbf16>, vector<32x128xf32> -> vector<32x128xf32>
    %27 = arith.addf %23, %26 : vector<32x128xf32>
    %c0_15 = arith.constant 0 : index
    %c0_16 = arith.constant 0 : index
    %28 = vector.load %arg8[%c0_15, %c0_16] : memref<32x128xf32, #tpu.memory_space<vmem>>, vector<32x128xf32>
    tpu.vector_store %arg8[%c0_15, %c0_16], %27 {strides = array<i32>} : memref<32x128xf32, #tpu.memory_space<vmem>>, vector<32x128xf32>,
    %c0_i32_17 = arith.constant 0 : i32
    %29 = arith.cmpi eq, %arg1, %c0_i32_17 : i32
    %30 = arith.extui %29 : i1 to i32
    %c0_i32_18 = arith.constant 0 : i32
    %31 = arith.cmpi ne, %30, %c0_i32_18 : i32
    scf.if %31 {
      %c0_19 = arith.constant 0 : index
      %c0_20 = arith.constant 0 : index
      %32 = vector.load %arg8[%c0_19, %c0_20] : memref<32x128xf32, #tpu.memory_space<vmem>>, vector<32x128xf32>
      %c0_21 = arith.constant 0 : index
      %c0_22 = arith.constant 0 : index
      %33 = vector.load %arg6[%c0_21, %c0_22] : memref<1x128xf32, #tpu.memory_space<vmem>>, vector<1x128xf32>
      %34 = vector.broadcast %33 : vector<1x128xf32> to vector<32x128xf32>
      %35 = arith.addf %32, %34 : vector<32x128xf32>
      %c0_23 = arith.constant 0 : index
      %c0_24 = arith.constant 0 : index
      %36 = vector.load %arg7[%c0_23, %c0_24] : memref<32x128xf32, #tpu.memory_space<vmem>>, vector<32x128xf32>
      tpu.vector_store %arg7[%c0_23, %c0_24], %35 {strides = array<i32>} : memref<32x128xf32, #tpu.memory_space<vmem>>, vector<32x128xf32>,
    } else {
    }
    return
  }
  func.func @transform_0(%arg0: i32, %arg1: i32) -> (i32, i32) {
    %c0_i32 = arith.constant 0 : i32
    %c0_i32_0 = arith.constant 0 : i32
    return %arg0, %c0_i32 : i32, i32
  }
  func.func @transform_1(%arg0: i32, %arg1: i32) -> (i32, i32) {
    %c0_i32 = arith.constant 0 : i32
    %c0_i32_0 = arith.constant 0 : i32
    return %c0_i32, %arg1 : i32, i32
  }
  func.func @transform_2(%arg0: i32, %arg1: i32) -> (i32, i32) {
    %c0_i32 = arith.constant 0 : i32
    %c0_i32_0 = arith.constant 0 : i32
    return %c0_i32, %arg1 : i32, i32
  }
  func.func @transform_3(%arg0: i32, %arg1: i32) -> (i32, i32) {
    %c0_i32 = arith.constant 0 : i32
    %c0_i32_0 = arith.constant 0 : i32
    return %arg1, %c0_i32 : i32, i32
  }
  func.func @transform_4(%arg0: i32, %arg1: i32) -> (i32, i32) {
    %c0_i32 = arith.constant 0 : i32
    %c0_i32_0 = arith.constant 0 : i32
    %c0_i32_1 = arith.constant 0 : i32
    return %c0_i32, %c0_i32_0 : i32, i32
  }
  func.func @transform_5(%arg0: i32, %arg1: i32) -> (i32, i32) {
    %c0_i32 = arith.constant 0 : i32
    %c0_i32_0 = arith.constant 0 : i32
    return %arg0, %c0_i32 : i32, i32
  }
}

</mosaic_0001>

<llo_original>
// kernel: feed_forward.1
$region0: #{feed_forward.1}
  #allocation0 [shape = 'u32[]', space=smem, size = 0x4, offset = 0x4, fixed_abs, tag = 'smem constant byte address 0x4 - core index']
  #allocation1 [shape = 'u32[144,128]{1,0:T(1,128)}', space=vmem, size = 0x12000, scoped, tag = 'internal scratch']
  #allocation2 [shape = 'f32[32,128]{1,0:T(8,128)}', space=vmem, size = 0x4000, scoped, tag = 'scratch operand']
  %s0 = inlined_call_operand.hbm [shape: f32[32,128], index: 0, kind: input, shape index: {}]
  %s1 = inlined_call_operand.hbm [shape: bf16[128,256], index: 1, kind: input, shape index: {}]
  %s2 = inlined_call_operand.vmem [shape: f32[1,256], index: 2, kind: input, shape index: {}]
  %s3 = inlined_call_operand.hbm [shape: bf16[256,128], index: 3, kind: input, shape index: {}]
  %s4 = inlined_call_operand.vmem [shape: f32[1,128], index: 4, kind: input, shape index: {}]
  %s5 = inlined_call_operand.hbm [shape: f32[32,128], index: 5, kind: output, shape index: {}]
  %s6 = sld [smem:[#allocation0]]
  $region50: #{feed_forward.1} parent=0
    _
  %s8 = ssub.s32 1, %s6
  %s9 = scalar_select 0, %s8, %s6
  $region1: #{feed_forward.1} parent=0
    #allocation3 [shape = 'u8[16384]{0}', space=vmem, size = 0x4000, scoped, tag = 'input window, operand 0, single buffered']
    #allocation4 [shape = 's32[1]{0}', space=sflag, size = 0x4, scoped, tag = 'scoped memory for feed_forward.1']
    #allocation5 [shape = 's32[1]{0}', space=sflag, size = 0x4, scoped, tag = 'scoped memory for feed_forward.1']
    #allocation6 [shape = 'u8[65536]{0}', space=vmem, size = 0x10000, scoped, tag = 'input window, operand 1, single buffered']
    #allocation7 [shape = 's32[1]{0}', space=sflag, size = 0x4, scoped, tag = 'scoped memory for feed_forward.1']
    #allocation8 [shape = 'u8[65536]{0}', space=vmem, size = 0x10000, scoped, tag = 'input window, operand 3, single buffered']
    #allocation9 [shape = 'u8[16384]{0}', space=vmem, size = 0x4000, scoped, tag = 'output window, operand 0, single buffered']
    %10 = vsyncpa [#allocation4], 0
    %11 = vsyncpa [#allocation7], 0
    %12 = vsyncpa [#allocation5], 0
    // Predicated region
    $region2: #{feed_forward.1} parent=1 // pred_check
      _
    $region3: #{feed_forward.1} parent=1 // pred_check_branch
      %14 = sbr.rel (0) target = $region5
    $region4: #{feed_forward.1} parent=1 // pred_region
      %s16 = ssub.s32 512, 512
      %17 = vsyncadd [#allocation4], %s16
      %s18 = sshll.u32 [#allocation3], 4
      %s19 = int_to_ptr.vmem [resolvable:$true] %s18
      %24 = dma.hbm_to_vmem [thread:$0]  %s0, 512, %s19, [#allocation4], 128, 128, 8
    $region5: #{feed_forward.1} parent=1 // pred_fallthru
      _
    // Predicated region
    $region6: #{feed_forward.1} parent=1 // pred_check
      _
    $region7: #{feed_forward.1} parent=1 // pred_check_branch
      %26 = sbr.rel (0) target = $region9
    $region8: #{feed_forward.1} parent=1 // pred_region
      %s28 = ssub.s32 2048, 2048
      %29 = vsyncadd [#allocation7], %s28
      %s30 = sshll.u32 [#allocation6], 4
      %s31 = int_to_ptr.vmem [resolvable:$true] %s30
      %36 = dma.hbm_to_vmem [thread:$0]  %s1, 2048, %s31, [#allocation7], 128, 128, 8
    $region9: #{feed_forward.1} parent=1 // pred_fallthru
      _
    // Predicated region
    $region10: #{feed_forward.1} parent=1 // pred_check
      _
    $region11: #{feed_forward.1} parent=1 // pred_check_branch
      %38 = sbr.rel (0) target = $region13
    $region12: #{feed_forward.1} parent=1 // pred_region
      _
    $region13: #{feed_forward.1} parent=1 // pred_fallthru
      _
    // Predicated region
    $region14: #{feed_forward.1} parent=1 // pred_check
      _
    $region15: #{feed_forward.1} parent=1 // pred_check_branch
      %40 = sbr.rel (0) target = $region17
    $region16: #{feed_forward.1} parent=1 // pred_region
      %s42 = ssub.s32 2048, 2048
      %43 = vsyncadd [#allocation7], %s42
      %s44 = sshll.u32 [#allocation8], 4
      %s45 = int_to_ptr.vmem [resolvable:$true] %s44
      %50 = dma.hbm_to_vmem [thread:$0]  %s3, 2048, %s45, [#allocation7], 64, 64, 4
    $region17: #{feed_forward.1} parent=1 // pred_fallthru
      _
    // Predicated region
    $region18: #{feed_forward.1} parent=1 // pred_check
      _
    $region19: #{feed_forward.1} parent=1 // pred_check_branch
      %52 = sbr.rel (0) target = $region21
    $region20: #{feed_forward.1} parent=1 // pred_region
      _
    $region21: #{feed_forward.1} parent=1 // pred_fallthru
      _
    // Predicated region
    $region22: #{feed_forward.1} parent=1 // pred_check
      _
    $region23: #{feed_forward.1} parent=1 // pred_check_branch
      %54 = sbr.rel (0) target = $region25
    $region24: #{feed_forward.1} parent=1 // pred_region
      %55 = dma.done [#allocation4], 512
    $region25: #{feed_forward.1} parent=1 // pred_fallthru
      _
    // Predicated region
    $region26: #{feed_forward.1} parent=1 // pred_check
      _
    $region27: #{feed_forward.1} parent=1 // pred_check_branch
      %57 = sbr.rel (0) target = $region29
    $region28: #{feed_forward.1} parent=1 // pred_region
      %58 = dma.done [#allocation7], 2048
    $region29: #{feed_forward.1} parent=1 // pred_fallthru
      _
    // Predicated region
    $region30: #{feed_forward.1} parent=1 // pred_check
      _
    $region31: #{feed_forward.1} parent=1 // pred_check_branch
      %60 = sbr.rel (0) target = $region33
    $region32: #{feed_forward.1} parent=1 // pred_region
      %61 = dma.done [#allocation7], 2048
    $region33: #{feed_forward.1} parent=1 // pred_fallthru
      _
    %p63 = scmp.eq.s32.totalorder 0, 0
    // Predicated region
    $region34: #{feed_forward.1} parent=1 // pred_check
      %p64 = pneg %p63
    $region35: #{feed_forward.1} parent=1 // pred_check_branch
      %66 = sbr.rel (%p64) target = $region37
    $region36: #{feed_forward.1} parent=1 // pred_region
      %67 = vst [vmem:[#allocation2] sm:$0xff] 0.0
      %68 = vst [vmem:[#allocation2 + $0x8] sm:$0xff] 0.0
      %69 = vst [vmem:[#allocation2 + $0x10] sm:$0xff] 0.0
      %70 = vst [vmem:[#allocation2 + $0x18] sm:$0xff] 0.0
    $region37: #{feed_forward.1} parent=1 // pred_fallthru
      _
    %v71 = vld [vmem:[#allocation3] sm:$0xff]
    %v72 = vld [vmem:[#allocation3 + $0x8] sm:$0xff]
    %v73 = vld [vmem:[#allocation3 + $0x10] sm:$0xff]
    %v74 = vld [vmem:[#allocation3 + $0x18] sm:$0xff]
    %v75 = vpack.c.bf16 %v72, %v71
    %v76 = vpack.c.bf16 %v74, %v73
    %v77 = vld [vmem:[#allocation6] sm:$0xff]
    %v78 = vld [vmem:[#allocation6 + $0x8] sm:$0xff]
    %v79 = vld [vmem:[#allocation6 + $0x10] sm:$0xff]
    %v80 = vld [vmem:[#allocation6 + $0x18] sm:$0xff]
    %v81 = vld [vmem:[#allocation6 + $0x20] sm:$0xff]
    %v82 = vld [vmem:[#allocation6 + $0x28] sm:$0xff]
    %v83 = vld [vmem:[#allocation6 + $0x30] sm:$0xff]
    %v84 = vld [vmem:[#allocation6 + $0x38] sm:$0xff]
    %v85 = vld [vmem:[#allocation6 + $0x40] sm:$0xff]
    %v86 = vld [vmem:[#allocation6 + $0x48] sm:$0xff]
    %v87 = vld [vmem:[#allocation6 + $0x50] sm:$0xff]
    %v88 = vld [vmem:[#allocation6 + $0x58] sm:$0xff]
    %v89 = vld [vmem:[#allocation6 + $0x60] sm:$0xff]
    %v90 = vld [vmem:[#allocation6 + $0x68] sm:$0xff]
    %v91 = vld [vmem:[#allocation6 + $0x70] sm:$0xff]
    %v92 = vld [vmem:[#allocation6 + $0x78] sm:$0xff]
    %v93 = vld [vmem:[%s2] sm:$0x3]
    %v95 = vlaneseq
    %v96 = vshrl.u32 %v95, 7
    %v97 = vsub.s32 0, %v96
    %v98 = vrot.slane %v93, %v97
    %v99 = vlaneseq
    %v100 = vshrl.u32 %v99, 7
    %v101 = vsub.s32 1, %v100
    %v102 = vrot.slane %v93, %v101
    %v121 = vunpack.c.l.b16 %v77
    %v122 = vunpack.c.h.b16 %v77
    %v123 = vunpack.c.l.b16 %v78
    %v124 = vunpack.c.h.b16 %v78
    %v125 = vunpack.c.l.b16 %v79
    %v126 = vunpack.c.h.b16 %v79
    %v127 = vunpack.c.l.b16 %v80
    %v128 = vunpack.c.h.b16 %v80
    %v129 = vunpack.c.l.b16 %v81
    %v130 = vunpack.c.h.b16 %v81
    %v131 = vunpack.c.l.b16 %v82
    %v132 = vunpack.c.h.b16 %v82
    %v133 = vunpack.c.l.b16 %v83
    %v134 = vunpack.c.h.b16 %v83
    %v135 = vunpack.c.l.b16 %v84
    %v136 = vunpack.c.h.b16 %v84
    %v137 = vunpack.c.l.b16 %v85
    %v138 = vunpack.c.h.b16 %v85
    %v139 = vunpack.c.l.b16 %v86
    %v140 = vunpack.c.h.b16 %v86
    %v141 = vunpack.c.l.b16 %v87
    %v142 = vunpack.c.h.b16 %v87
    %v143 = vunpack.c.l.b16 %v88
    %v144 = vunpack.c.h.b16 %v88
    %v145 = vunpack.c.l.b16 %v89
    %v146 = vunpack.c.h.b16 %v89
    %v147 = vunpack.c.l.b16 %v90
    %v148 = vunpack.c.h.b16 %v90
    %v149 = vunpack.c.l.b16 %v91
    %v150 = vunpack.c.h.b16 %v91
    %v151 = vunpack.c.l.b16 %v92
    %v152 = vunpack.c.h.b16 %v92
    %v153 = vpack.c.b16 %v123, %v121
    %v154 = vpack.c.b16 %v124, %v122
    %v155 = vpack.c.b16 %v127, %v125
    %v156 = vpack.c.b16 %v128, %v126
    %v157 = vpack.c.b16 %v131, %v129
    %v158 = vpack.c.b16 %v132, %v130
    %v159 = vpack.c.b16 %v135, %v133
    %v160 = vpack.c.b16 %v136, %v134
    %v161 = vpack.c.b16 %v139, %v137
    %v162 = vpack.c.b16 %v140, %v138
    %v163 = vpack.c.b16 %v143, %v141
    %v164 = vpack.c.b16 %v144, %v142
    %v165 = vpack.c.b16 %v147, %v145
    %v166 = vpack.c.b16 %v148, %v146
    %v167 = vpack.c.b16 %v151, %v149
    %v168 = vpack.c.b16 %v152, %v150
    %185 = vmatprep.subr.bf16.mxu0 %v154
    %186 = vmatpush1.bf16.msra.mxu0 %v153
    %187 = vmatprep.subr.bf16.mxu0 %v156
    %188 = vmatpush1.bf16.msra.mxu0 %v155
    %189 = vmatprep.subr.bf16.mxu0 %v158
    %190 = vmatpush1.bf16.msra.mxu0 %v157
    %191 = vmatprep.subr.bf16.mxu0 %v160
    %192 = vmatpush1.bf16.msra.mxu0 %v159
    %193 = vmatprep.subr.bf16.mxu0 %v162
    %194 = vmatpush1.bf16.msra.mxu0 %v161
    %195 = vmatprep.subr.bf16.mxu0 %v164
    %196 = vmatpush1.bf16.msra.mxu0 %v163
    %197 = vmatprep.subr.bf16.mxu0 %v166
    %198 = vmatpush1.bf16.msra.mxu0 %v165
    %199 = vmatprep.subr.bf16.mxu0 %v168
    %200 = vmatpush1.bf16.msra.mxu0 %v167
    %201 = vmatprep.subr.bf16.mxu0 0
    %202 = vmatpush1.bf16.msra.mxu0 0
    %203 = vmatprep.subr.bf16.mxu0 0
    %204 = vmatpush1.bf16.msra.mxu0 0
    %205 = vmatprep.subr.bf16.mxu0 0
    %206 = vmatpush1.bf16.msra.mxu0 0
    %207 = vmatprep.subr.bf16.mxu0 0
    %208 = vmatpush1.bf16.msra.mxu0 0
    %209 = vmatprep.subr.bf16.mxu0 0
    %210 = vmatpush1.bf16.msra.mxu0 0
    %211 = vmatprep.subr.bf16.mxu0 0
    %212 = vmatpush1.bf16.msra.mxu0 0
    %213 = vmatprep.subr.bf16.mxu0 0
    %214 = vmatpush1.bf16.msra.mxu0 0
    %215 = vmatprep.subr.bf16.mxu0 0
    %216 = vmatpush1.bf16.msra.mxu0 0
    %217 = vmatprep.mubr.bf16.mxu0 0
    %218 = vmatmul.mubr.bf16.gmra.mrb[0].mxu0 %v75
    %v219 = vpop.f32.mrb[0].mxu0
    %v220 = vadd.f32 %v98, %v219
    %v221 = vpop.f32.mrb[0].mxu0
    %v222 = vadd.f32 %v102, %v221
    %v223 = vpop.f32.mrb[0].mxu0
    %v224 = vadd.f32 %v98, %v223
    %v225 = vpop.f32.mrb[0].mxu0
    %v226 = vadd.f32 %v102, %v225
    %227 = vmatprep.mubr.bf16.mxu0 0
    %228 = vmatmul.mubr.bf16.gmra.mrb[0].mxu0 %v76
    %v229 = vpop.f32.mrb[0].mxu0
    %v230 = vadd.f32 %v98, %v229
    %v231 = vpop.f32.mrb[0].mxu0
    %v232 = vadd.f32 %v102, %v231
    %v233 = vpop.f32.mrb[0].mxu0
    %v234 = vadd.f32 %v98, %v233
    %v235 = vpop.f32.mrb[0].mxu0
    %v236 = vadd.f32 %v102, %v235
    %237 = vdwg.mxu0
    %v238 = vmul.f32 %v220, %v220
    %v239 = vmul.f32 %v222, %v222
    %v240 = vmul.f32 %v224, %v224
    %v241 = vmul.f32 %v226, %v226
    %v242 = vmul.f32 %v230, %v230
    %v243 = vmul.f32 %v232, %v232
    %v244 = vmul.f32 %v234, %v234
    %v245 = vmul.f32 %v236, %v236
    %v246 = vmul.f32 %v220, %v238
    %v247 = vmul.f32 %v222, %v239
    %v248 = vmul.f32 %v224, %v240
    %v249 = vmul.f32 %v226, %v241
    %v250 = vmul.f32 %v230, %v242
    %v251 = vmul.f32 %v232, %v243
    %v252 = vmul.f32 %v234, %v244
    %v253 = vmul.f32 %v236, %v245
    %v254 = vmul.f32 %v246, 0.044715
    %v255 = vmul.f32 %v247, 0.044715
    %v256 = vmul.f32 %v248, 0.044715
    %v257 = vmul.f32 %v249, 0.044715
    %v258 = vmul.f32 %v250, 0.044715
    %v259 = vmul.f32 %v251, 0.044715
    %v260 = vmul.f32 %v252, 0.044715
    %v261 = vmul.f32 %v253, 0.044715
    %v262 = vadd.f32 %v220, %v254
    %v263 = vadd.f32 %v222, %v255
    %v264 = vadd.f32 %v224, %v256
    %v265 = vadd.f32 %v226, %v257
    %v266 = vadd.f32 %v230, %v258
    %v267 = vadd.f32 %v232, %v259
    %v268 = vadd.f32 %v234, %v260
    %v269 = vadd.f32 %v236, %v261
    %v270 = vmul.f32 %v262, 0.7978846
    %v271 = vmul.f32 %v263, 0.7978846
    %v272 = vmul.f32 %v264, 0.7978846
    %v273 = vmul.f32 %v265, 0.7978846
    %v274 = vmul.f32 %v266, 0.7978846
    %v275 = vmul.f32 %v267, 0.7978846
    %v276 = vmul.f32 %v268, 0.7978846
    %v277 = vmul.f32 %v269, 0.7978846
    %v278 = vtanh.pop %v270
    %v279 = vtanh.pop %v271
    %v280 = vtanh.pop %v272
    %v281 = vtanh.pop %v273
    %v282 = vtanh.pop %v274
    %v283 = vtanh.pop %v275
    %v284 = vtanh.pop %v276
    %v285 = vtanh.pop %v277
    %v286 = vadd.f32 %v278, 1.0
    %v287 = vadd.f32 %v279, 1.0
    %v288 = vadd.f32 %v280, 1.0
    %v289 = vadd.f32 %v281, 1.0
    %v290 = vadd.f32 %v282, 1.0
    %v291 = vadd.f32 %v283, 1.0
    %v292 = vadd.f32 %v284, 1.0
    %v293 = vadd.f32 %v285, 1.0
    %v294 = vmul.f32 %v286, 0.5
    %v295 = vmul.f32 %v287, 0.5
    %v296 = vmul.f32 %v288, 0.5
    %v297 = vmul.f32 %v289, 0.5
    %v298 = vmul.f32 %v290, 0.5
    %v299 = vmul.f32 %v291, 0.5
    %v300 = vmul.f32 %v292, 0.5
    %v301 = vmul.f32 %v293, 0.5
    %v302 = vmul.f32 %v220, %v294
    %v303 = vmul.f32 %v222, %v295
    %v304 = vmul.f32 %v224, %v296
    %v305 = vmul.f32 %v226, %v297
    %v306 = vmul.f32 %v230, %v298
    %v307 = vmul.f32 %v232, %v299
    %v308 = vmul.f32 %v234, %v300
    %v309 = vmul.f32 %v236, %v301
    %v310 = vld [vmem:[#allocation2] sm:$0xff]
    %v311 = vld [vmem:[#allocation2 + $0x8] sm:$0xff]
    %v312 = vld [vmem:[#allocation2 + $0x10] sm:$0xff]
    %v313 = vld [vmem:[#allocation2 + $0x18] sm:$0xff]
    %v314 = vpack.c.bf16 %v304, %v302
    %v315 = vpack.c.bf16 %v305, %v303
    %v316 = vpack.c.bf16 %v308, %v306
    %v317 = vpack.c.bf16 %v309, %v307
    %v318 = vld [vmem:[#allocation8] sm:$0xf]
    %v319 = vld [vmem:[#allocation8 + $0x4] sm:$0xf]
    %v320 = vld [vmem:[#allocation8 + $0x8] sm:$0xf]
    %v321 = vld [vmem:[#allocation8 + $0xc] sm:$0xf]
    %v322 = vld [vmem:[#allocation8 + $0x10] sm:$0xf]
    %v323 = vld [vmem:[#allocation8 + $0x14] sm:$0xf]
    %v324 = vld [vmem:[#allocation8 + $0x18] sm:$0xf]
    %v325 = vld [vmem:[#allocation8 + $0x1c] sm:$0xf]
    %v326 = vld [vmem:[#allocation8 + $0x20] sm:$0xf]
    %v327 = vld [vmem:[#allocation8 + $0x24] sm:$0xf]
    %v328 = vld [vmem:[#allocation8 + $0x28] sm:$0xf]
    %v329 = vld [vmem:[#allocation8 + $0x2c] sm:$0xf]
    %v330 = vld [vmem:[#allocation8 + $0x30] sm:$0xf]
    %v331 = vld [vmem:[#allocation8 + $0x34] sm:$0xf]
    %v332 = vld [vmem:[#allocation8 + $0x38] sm:$0xf]
    %v333 = vld [vmem:[#allocation8 + $0x3c] sm:$0xf]
    %v334 = vld [vmem:[#allocation8 + $0x40] sm:$0xf]
    %v335 = vld [vmem:[#allocation8 + $0x44] sm:$0xf]
    %v336 = vld [vmem:[#allocation8 + $0x48] sm:$0xf]
    %v337 = vld [vmem:[#allocation8 + $0x4c] sm:$0xf]
    %v338 = vld [vmem:[#allocation8 + $0x50] sm:$0xf]
    %v339 = vld [vmem:[#allocation8 + $0x54] sm:$0xf]
    %v340 = vld [vmem:[#allocation8 + $0x58] sm:$0xf]
    %v341 = vld [vmem:[#allocation8 + $0x5c] sm:$0xf]
    %v342 = vld [vmem:[#allocation8 + $0x60] sm:$0xf]
    %v343 = vld [vmem:[#allocation8 + $0x64] sm:$0xf]
    %v344 = vld [vmem:[#allocation8 + $0x68] sm:$0xf]
    %v345 = vld [vmem:[#allocation8 + $0x6c] sm:$0xf]
    %v346 = vld [vmem:[#allocation8 + $0x70] sm:$0xf]
    %v347 = vld [vmem:[#allocation8 + $0x74] sm:$0xf]
    %v348 = vld [vmem:[#allocation8 + $0x78] sm:$0xf]
    %v349 = vld [vmem:[#allocation8 + $0x7c] sm:$0xf]
    %v382 = vunpack.c.l.b16 %v318
    %v383 = vunpack.c.l.b16 %v319
    %v384 = vunpack.c.l.b16 %v320
    %v385 = vunpack.c.l.b16 %v321
    %v386 = vunpack.c.l.b16 %v322
    %v387 = vunpack.c.l.b16 %v323
    %v388 = vunpack.c.l.b16 %v324
    %v389 = vunpack.c.l.b16 %v325
    %v390 = vunpack.c.l.b16 %v326
    %v391 = vunpack.c.l.b16 %v327
    %v392 = vunpack.c.l.b16 %v328
    %v393 = vunpack.c.l.b16 %v329
    %v394 = vunpack.c.l.b16 %v330
    %v395 = vunpack.c.l.b16 %v331
    %v396 = vunpack.c.l.b16 %v332
    %v397 = vunpack.c.l.b16 %v333
    %v398 = vunpack.c.l.b16 %v334
    %v399 = vunpack.c.l.b16 %v335
    %v400 = vunpack.c.l.b16 %v336
    %v401 = vunpack.c.l.b16 %v337
    %v402 = vunpack.c.l.b16 %v338
    %v403 = vunpack.c.l.b16 %v339
    %v404 = vunpack.c.l.b16 %v340
    %v405 = vunpack.c.l.b16 %v341
    %v406 = vunpack.c.l.b16 %v342
    %v407 = vunpack.c.l.b16 %v343
    %v408 = vunpack.c.l.b16 %v344
    %v409 = vunpack.c.l.b16 %v345
    %v410 = vunpack.c.l.b16 %v346
    %v411 = vunpack.c.l.b16 %v347
    %v412 = vunpack.c.l.b16 %v348
    %v413 = vunpack.c.l.b16 %v349
    %v414 = vpack.c.b16 %v383, %v382
    %v415 = vpack.c.b16 %v385, %v384
    %v416 = vpack.c.b16 %v387, %v386
    %v417 = vpack.c.b16 %v389, %v388
    %v418 = vpack.c.b16 %v391, %v390
    %v419 = vpack.c.b16 %v393, %v392
    %v420 = vpack.c.b16 %v395, %v394
    %v421 = vpack.c.b16 %v397, %v396
    %v422 = vpack.c.b16 %v399, %v398
    %v423 = vpack.c.b16 %v401, %v400
    %v424 = vpack.c.b16 %v403, %v402
    %v425 = vpack.c.b16 %v405, %v404
    %v426 = vpack.c.b16 %v407, %v406
    %v427 = vpack.c.b16 %v409, %v408
    %v428 = vpack.c.b16 %v411, %v410
    %v429 = vpack.c.b16 %v413, %v412
    %446 = vmatprep.subr.bf16.mxu0 0
    %447 = vmatpush1.bf16.msra.mxu0 %v414
    %448 = vmatprep.subr.bf16.mxu0 0
    %449 = vmatpush1.bf16.msra.mxu0 %v415
    %450 = vmatprep.subr.bf16.mxu0 0
    %451 = vmatpush1.bf16.msra.mxu0 %v416
    %452 = vmatprep.subr.bf16.mxu0 0
    %453 = vmatpush1.bf16.msra.mxu0 %v417
    %454 = vmatprep.subr.bf16.mxu0 0
    %455 = vmatpush1.bf16.msra.mxu0 %v418
    %456 = vmatprep.subr.bf16.mxu0 0
    %457 = vmatpush1.bf16.msra.mxu0 %v419
    %458 = vmatprep.subr.bf16.mxu0 0
    %459 = vmatpush1.bf16.msra.mxu0 %v420
    %460 = vmatprep.subr.bf16.mxu0 0
    %461 = vmatpush1.bf16.msra.mxu0 %v421
    %462 = vmatprep.subr.bf16.mxu0 0
    %463 = vmatpush1.bf16.msra.mxu0 %v422
    %464 = vmatprep.subr.bf16.mxu0 0
    %465 = vmatpush1.bf16.msra.mxu0 %v423
    %466 = vmatprep.subr.bf16.mxu0 0
    %467 = vmatpush1.bf16.msra.mxu0 %v424
    %468 = vmatprep.subr.bf16.mxu0 0
    %469 = vmatpush1.bf16.msra.mxu0 %v425
    %470 = vmatprep.subr.bf16.mxu0 0
    %471 = vmatpush1.bf16.msra.mxu0 %v426
    %472 = vmatprep.subr.bf16.mxu0 0
    %473 = vmatpush1.bf16.msra.mxu0 %v427
    %474 = vmatprep.subr.bf16.mxu0 0
    %475 = vmatpush1.bf16.msra.mxu0 %v428
    %476 = vmatprep.subr.bf16.mxu0 0
    %477 = vmatpush1.bf16.msra.mxu0 %v429
    %478 = vmatprep.mubr.bf16.mxu0 %v315
    %479 = vmatmul.mubr.bf16.gmra.mrb[0].mxu0 %v314
    %v480 = vpop.f32.mrb[0].mxu0
    %v481 = vadd.f32 0.0, %v480
    %v482 = vpop.f32.mrb[0].mxu0
    %v483 = vpop.f32.mrb[0].mxu0
    %v484 = vadd.f32 0.0, %v483
    %v485 = vpop.f32.mrb[0].mxu0
    %486 = vmatprep.mubr.bf16.mxu0 %v317
    %487 = vmatmul.mubr.bf16.gmra.mrb[0].mxu0 %v316
    %v488 = vpop.f32.mrb[0].mxu0
    %v489 = vadd.f32 0.0, %v488
    %v490 = vpop.f32.mrb[0].mxu0
    %v491 = vpop.f32.mrb[0].mxu0
    %v492 = vadd.f32 0.0, %v491
    %v493 = vpop.f32.mrb[0].mxu0
    %494 = vdwg.mxu0
    %v495 = vadd.f32 %v310, %v481
    %v496 = vadd.f32 %v311, %v484
    %v497 = vadd.f32 %v312, %v489
    %v498 = vadd.f32 %v313, %v492
    %499 = vst [vmem:[#allocation2] sm:$0xff] %v495
    %500 = vst [vmem:[#allocation2 + $0x8] sm:$0xff] %v496
    %501 = vst [vmem:[#allocation2 + $0x10] sm:$0xff] %v497
    %502 = vst [vmem:[#allocation2 + $0x18] sm:$0xff] %v498
    // Predicated region
    $region38: #{feed_forward.1} parent=1 // pred_check
      %p503 = pneg %p63
    $region39: #{feed_forward.1} parent=1 // pred_check_branch
      %505 = sbr.rel (%p503) target = $region41
    $region40: #{feed_forward.1} parent=1 // pred_region
      %v506 = vld [vmem:[#allocation2] sm:$0xff]
      %v507 = vld [vmem:[#allocation2 + $0x8] sm:$0xff]
      %v508 = vld [vmem:[#allocation2 + $0x10] sm:$0xff]
      %v509 = vld [vmem:[#allocation2 + $0x18] sm:$0xff]
      %v510 = vld [vmem:[%s4] sm:$0x1]
      %v512 = vlaneseq
      %v513 = vshrl.u32 %v512, 7
      %v514 = vsub.s32 0, %v513
      %v515 = vrot.slane %v510, %v514
      %v517 = vadd.f32 %v506, %v515
      %v518 = vadd.f32 %v507, %v515
      %v519 = vadd.f32 %v508, %v515
      %v520 = vadd.f32 %v509, %v515
      %521 = vst [vmem:[#allocation9] sm:$0xff] %v517
      %522 = vst [vmem:[#allocation9 + $0x8] sm:$0xff] %v518
      %523 = vst [vmem:[#allocation9 + $0x10] sm:$0xff] %v519
      %524 = vst [vmem:[#allocation9 + $0x18] sm:$0xff] %v520
    $region41: #{feed_forward.1} parent=1 // pred_fallthru
      _
    // Predicated region
    $region42: #{feed_forward.1} parent=1 // pred_check
      _
    $region43: #{feed_forward.1} parent=1 // pred_check_branch
      %526 = sbr.rel (0) target = $region45
    $region44: #{feed_forward.1} parent=1 // pred_region
      %s528 = ssub.s32 512, 512
      %529 = vsyncadd [#allocation5], %s528
      %s530 = sshll.u32 [#allocation9], 4
      %s531 = int_to_ptr.vmem [resolvable:$true] %s530
      %536 = dma.vmem_to_hbm [thread:$0]  %s531, 512, %s5, [#allocation5], 128, 128, 8
    $region45: #{feed_forward.1} parent=1 // pred_fallthru
      _
    // Predicated region
    $region46: #{feed_forward.1} parent=1 // pred_check
      _
    $region47: #{feed_forward.1} parent=1 // pred_check_branch
      %538 = sbr.rel (0) target = $region49
    $region48: #{feed_forward.1} parent=1 // pred_region
      %539 = dma.done [#allocation5], 512
    $region49: #{feed_forward.1} parent=1 // pred_fallthru
      _
    %540 = vsyncpa [#allocation4], 1
    %541 = vsyncpa [#allocation7], 1
    %542 = vsyncpa [#allocation5], 1

</llo_original>
